<compile_context>
chip_gen: v7x
topology: tpu7x:2x2x1
jax: 0.10.0
libtpu: 0.0.40
codegen_flags: <defaults>
</compile_context>

<pallas_src>
import functools
from dataclasses import dataclass

import jax
import jax.numpy as jnp
from jax.experimental import pallas as pl
from jax.experimental.pallas import tpu as pltpu


@dataclass
class DiscriminatorConfig:
    mpd_n_blocks: int = 2
    mpd_kernel_size: int = 5
    mpd_stride: int = 3
    mpd_post_conv_kernel_size: int = 3
    leaky_relu_slope: float = 0.1


def dilation2padding(kernel_size, dilation):
    return (kernel_size * dilation - dilation) // 2


def _round_up(x, m):
    return (x + m - 1) // m * m


# ----------------------------- Pallas kernel ------------------------------ #
def _conv1d_h_kernel(x_ref, w_ref, b_ref, o_ref, xpad_ref, *,
                     K, stride, TH, pad, pad_off, h_valid, h_scr,
                     slope, apply_act):
    """Conv2d with (K,1) kernel == 1-D conv along H per column; bias + leaky_relu fused.

    x_ref   : (H_store, C_in)  full column for grid index n (= b*period + w); rows
                               [0, h_valid) are valid, the rest is alignment garbage.
    w_ref   : (K*C_in, C_out)  im2col-reshaped weights
    b_ref   : (1, C_out)
    o_ref   : (TH, C_out)      output H-tile t of this column
    xpad_ref: (h_scr, C_in)    VMEM scratch: zero-padded input column (filled at t==0)
    """
    t = pl.program_id(1)
    cin = x_ref.shape[-1]

    # Fill the zero-padded input column once per column; later H tiles reuse it.
    @pl.when(t == 0)
    def _():
        if pad_off > 0:
            xpad_ref[:pad_off, :] = jnp.zeros((pad_off, cin), xpad_ref.dtype)
        tail = h_scr - (pad_off + h_valid)
        if tail > 0:
            xpad_ref[pad_off + h_valid:, :] = jnp.zeros((tail, cin), xpad_ref.dtype)
        xpad_ref[pad_off:pad_off + h_valid, :] = x_ref[:h_valid, :]

    # im2col: K strided sublane reads, concatenated along lanes -> one deep matmul.
    base = pl.multiple_of(t * (TH * stride), 8) + (pad_off - pad)
    taps = []
    for k in range(K):                                   # K <= 5, static unroll
        if stride > 1:
            taps.append(xpad_ref[pl.ds(base + k, TH, stride=stride), :])
        else:
            taps.append(xpad_ref[pl.ds(base + k, TH), :])
    xcol = taps[0] if K == 1 else jnp.concatenate(taps, axis=-1)   # (TH, K*C_in)

    acc = jnp.dot(xcol, w_ref[...], preferred_element_type=jnp.float32)
    acc = acc + b_ref[...]
    if apply_act:
        acc = jnp.maximum(acc, acc * slope)              # leaky_relu
    o_ref[...] = acc.astype(o_ref.dtype)


def conv1d_h(x, h_valid, w, b, *, stride, pad, apply_act, slope, th_max=512):
    """x: (N, H_store, C_in), valid rows [0, h_valid). w: (K, C_in, C_out). b: (1, C_out).

    Returns (out, h_out) where out is (N, h_out_padded, C_out) with valid rows [0, h_out).
    """
    N, H_store, cin = x.shape
    K, _, cout = w.shape

    h_out = (h_valid + 2 * pad - K) // stride + 1
    TH = max(8, min(_round_up(th_max, 8), _round_up(h_out, 8)))
    num_t = -(-h_out // TH)
    h_out_p = num_t * TH
    pad_off = _round_up(pad, 8) if pad > 0 else 0        # keep the scratch copy 8-aligned
    h_scr = max((h_out_p - 1) * stride + K + (pad_off - pad), pad_off + h_valid)

    w2 = w.reshape(K * cin, cout)                        # tap-major, matches concat order

    kern = functools.partial(
        _conv1d_h_kernel, K=K, stride=stride, TH=TH, pad=pad, pad_off=pad_off,
        h_valid=h_valid, h_scr=h_scr, slope=slope, apply_act=apply_act)

    out = pl.pallas_call(
        kern,
        out_shape=jax.ShapeDtypeStruct((N, h_out_p, cout), x.dtype),
        grid=(N, num_t),
        in_specs=[
            pl.BlockSpec((None, H_store, cin), lambda n, t: (n, 0, 0)),   # fetched once per n
            pl.BlockSpec((K * cin, cout), lambda n, t: (0, 0)),
            pl.BlockSpec((1, cout), lambda n, t: (0, 0)),
        ],
        out_specs=pl.BlockSpec((None, TH, cout), lambda n, t: (n, t, 0)),
        scratch_shapes=[pltpu.VMEM((h_scr, cin), x.dtype)],
        compiler_params=pltpu.CompilerParams(
            dimension_semantics=("parallel", "arbitrary")),
    )(x, w2, b)
    return out, h_out


# --------------------------- parameters (glue) ----------------------------- #
def make_params(key, cfg: DiscriminatorConfig):
    layer_defs = []
    in_dim = 1
    for i in range(1, cfg.mpd_n_blocks * 2, 2):
        if i == cfg.mpd_n_blocks * 2 - 1:
            out_dim = 2 ** (i + 3)
        else:
            out_dim = 2 ** (i + 4)
        layer_defs.append(dict(cin=in_dim, cout=out_dim, K=cfg.mpd_kernel_size,
                               stride=cfg.mpd_stride,
                               pad=dilation2padding(cfg.mpd_kernel_size, 1), act=True))
        in_dim = out_dim
    layer_defs.append(dict(cin=in_dim, cout=in_dim, K=cfg.mpd_kernel_size,
                           stride=1, pad=2, act=True))
    layer_defs.append(dict(cin=in_dim, cout=1, K=cfg.mpd_post_conv_kernel_size,
                           stride=1, pad=1, act=False))

    params = []
    for d in layer_defs:
        key, kv, kg, kb = jax.random.split(key, 4)
        # weight_norm parametrization: w = g * v / ||v|| (norm over all dims but out-ch)
        v = 0.1 * jax.random.normal(kv, (d['cout'], d['cin'], d['K'], 1), jnp.float32)
        g = 1.0 + 0.05 * jax.random.normal(kg, (d['cout'],), jnp.float32)
        norm = jnp.sqrt(jnp.sum(v * v, axis=(1, 2, 3), keepdims=True)) + 1e-12
        w_ochw = v / norm * g[:, None, None, None]           # (Cout, Cin, K, 1)
        w_kio = jnp.transpose(w_ochw[..., 0], (2, 1, 0))     # (K, Cin, Cout)
        b = 0.05 * jax.random.normal(kb, (1, d['cout']), jnp.float32)
        params.append(dict(w=w_kio, b=b, **d))
    return params


# ------------------------------ forward pass ------------------------------- #
def period_block_forward(x, params, period, cfg: DiscriminatorConfig, fmap, th_max=512):
    """x: (B, T) waveform. Returns flattened logits (B, H_out*period); appends fmaps (NCHW)."""
    B, T = x.shape
    if T % period != 0:
        pad = period - T % period
        x = jnp.pad(x, ((0, 0), (0, pad)), mode='reflect')
        T = T + pad
    H = T // period
    # (B, T) -> (B*period, H, 1): period becomes part of the batch/grid axis.
    h = jnp.transpose(x.reshape(B, H, period), (0, 2, 1)).reshape(B * period, H, 1)
    h_valid = H

    acts = []
    for p in params:
        h, h_valid = conv1d_h(h, h_valid, p['w'], p['b'], stride=p['stride'],
                              pad=p['pad'], apply_act=p['act'],
                              slope=cfg.leaky_relu_slope, th_max=th_max)
        acts.append((h, h_valid))

    # fmaps in NCHW (transposes deferred to after the conv chain)
    tmp = []
    for a, hv in acts:
        C = a.shape[-1]
        a4 = a.reshape(B, period, -1, C)[:, :, :hv, :]       # (B, W, H_out, C)
        tmp.append(jnp.transpose(a4, (0, 3, 2, 1)))          # (B, C, H_out, W)
    fmap.append(tmp)

    # conv_post output has C=1, so NCHW flatten(1,-1) == (B, H_out*period) in (h, w) order
    last, hv = acts[-1]
    y = last.reshape(B, period, -1)[:, :, :hv]               # (B, W, H_out)
    return jnp.transpose(y, (0, 2, 1)).reshape(B, -1)


# ------------------------- pure-JAX reference ------------------------------ #
def reference_forward(x, params, period, cfg, fmap):
    B, T = x.shape
    if T % period != 0:
        pad = period - T % period
        x = jnp.pad(x, ((0, 0), (0, pad)), mode='reflect')
        T = T + pad
    h = x.reshape(B, T // period, period, 1)
    for p in params:
        w = p['w'][:, None, :, :]                            # (K,1,Cin,Cout) HWIO
        h = jax.lax.conv_general_dilated(
            h, w, (p['stride'], 1), ((p['pad'], p['pad']), (0, 0)),
            dimension_numbers=('NHWC', 'HWIO', 'NHWC')) + p['b'].reshape(1, 1, 1, -1)
        if p['act']:
            h = jnp.where(h >= 0, h, h * cfg.leaky_relu_slope)
        fmap.append(jnp.transpose(h, (0, 3, 1, 2)))
    return h.reshape(B, -1)


if __name__ == "__main__":
    cfg = DiscriminatorConfig()
    period = 3
    B, T = 2, 250                                  # T % period != 0 -> reflect pad path

    key = jax.random.PRNGKey(0)
    kx, kp = jax.random.split(key)
    x = jax.random.normal(kx, (B, T), jnp.float32)
    params = make_params(kp, cfg)

    fmap = []
    # small th_max so the H-tiling path (num_t > 1) and h_valid < H_store path are exercised
    out = period_block_forward(x, params, period, cfg, fmap, th_max=16)
    out = jax.block_until_ready(out)

    ref_fmap = []
    ref_out = reference_forward(x, params, period, cfg, ref_fmap)
    assert out.shape == ref_out.shape, (out.shape, ref_out.shape)
    assert jnp.allclose(out, ref_out, atol=1e-4, rtol=1e-4)
    for a, r in zip(fmap[0], ref_fmap):
        assert a.shape == r.shape, (a.shape, r.shape)
        assert jnp.allclose(a, r, atol=1e-4, rtol=1e-4)

    print("KERNEL_OK")
</pallas_src>

<mosaic_0001>
module attributes {stable_mosaic.version = 11 : i64} {
  func.func @_conv1d_h_kernel(%arg0: i32, %arg1: i32, %arg2: memref<1x84x1xf32, #tpu.memory_space<vmem>>, %arg3: memref<5x32xf32, #tpu.memory_space<vmem>>, %arg4: memref<1x32xf32, #tpu.memory_space<vmem>>, %arg5: memref<1x16x32xf32, #tpu.memory_space<vmem>>, %arg6: memref<104x1xf32, #tpu.memory_space<vmem>>) attributes {dimension_semantics = [#tpu.dimension_semantics<parallel>, #tpu.dimension_semantics<arbitrary>], iteration_bounds = array<i64: 6, 2>, scalar_prefetch = 0 : i64, scratch_operands = 1 : i64, tpu.core_type = #tpu.core_type<tc>, window_params = [{transform_indices = @transform_0, window_bounds = array<i64: 1, 84, 1>}, {pipeline_mode = #tpu.pipeline_mode<synchronous>, transform_indices = @transform_1, window_bounds = array<i64: 5, 32>}, {pipeline_mode = #tpu.pipeline_mode<synchronous>, transform_indices = @transform_2, window_bounds = array<i64: 1, 32>}, {transform_indices = @transform_3, window_bounds = array<i64: 1, 16, 32>}]} {
    %c0_i32 = arith.constant 0 : i32
    %0 = arith.cmpi eq, %arg1, %c0_i32 : i32
    %1 = arith.extui %0 : i1 to i32
    %c0_i32_0 = arith.constant 0 : i32
    %2 = arith.cmpi ne, %1, %c0_i32_0 : i32
    scf.if %2 {
      %cst_14 = arith.constant 0.000000e+00 : f32
      %33 = vector.broadcast %cst_14 : f32 to vector<8x1xf32>
      %c0_15 = arith.constant 0 : index
      %c0_16 = arith.constant 0 : index
      %34 = vector.load %arg6[%c0_15, %c0_16] : memref<104x1xf32, #tpu.memory_space<vmem>>, vector<8x1xf32>
      tpu.vector_store %arg6[%c0_15, %c0_16], %33 {strides = array<i32>} : memref<104x1xf32, #tpu.memory_space<vmem>>, vector<8x1xf32>,
      %cst_17 = arith.constant 0.000000e+00 : f32
      %35 = vector.broadcast %cst_17 : f32 to vector<12x1xf32>
      %c92 = arith.constant 92 : index
      %c0_18 = arith.constant 0 : index
      %36 = vector.load %arg6[%c92, %c0_18] : memref<104x1xf32, #tpu.memory_space<vmem>>, vector<12x1xf32>
      tpu.vector_store %arg6[%c92, %c0_18], %35 {strides = array<i32>} : memref<104x1xf32, #tpu.memory_space<vmem>>, vector<12x1xf32>,
      %c0_19 = arith.constant 0 : index
      %c0_20 = arith.constant 0 : index
      %c0_21 = arith.constant 0 : index
      %37 = vector.load %arg2[%c0_19, %c0_20, %c0_21] : memref<1x84x1xf32, #tpu.memory_space<vmem>>, vector<1x84x1xf32>
      %38 = vector.shape_cast %37 : vector<1x84x1xf32> to vector<84x1xf32>
      %c8 = arith.constant 8 : index
      %c0_22 = arith.constant 0 : index
      %39 = vector.load %arg6[%c8, %c0_22] : memref<104x1xf32, #tpu.memory_space<vmem>>, vector<84x1xf32>
      tpu.vector_store %arg6[%c8, %c0_22], %38 {strides = array<i32>} : memref<104x1xf32, #tpu.memory_space<vmem>>, vector<84x1xf32>,
    } else {
    }
    %c48_i32 = arith.constant 48 : i32
    %3 = arith.muli %arg1, %c48_i32 : i32
    %4 = tpu.assume_multiple %3, 8 : i32
    %c6_i32 = arith.constant 6 : i32
    %5 = arith.addi %4, %c6_i32 : i32
    %c0_i32_1 = arith.constant 0 : i32
    %6 = arith.addi %5, %c0_i32_1 : i32
    %7 = arith.index_cast %6 : i32 to index
    %c0 = arith.constant 0 : index
    %8 = tpu.strided_load %arg6[%7, %c0] {strides = array<i32: 3, 1>} : memref<104x1xf32, #tpu.memory_space<vmem>>, vector<16x1xf32>
    %c1_i32 = arith.constant 1 : i32
    %9 = arith.addi %5, %c1_i32 : i32
    %10 = arith.index_cast %9 : i32 to index
    %c0_2 = arith.constant 0 : index
    %11 = tpu.strided_load %arg6[%10, %c0_2] {strides = array<i32: 3, 1>} : memref<104x1xf32, #tpu.memory_space<vmem>>, vector<16x1xf32>
    %c2_i32 = arith.constant 2 : i32
    %12 = arith.addi %5, %c2_i32 : i32
    %13 = arith.index_cast %12 : i32 to index
    %c0_3 = arith.constant 0 : index
    %14 = tpu.strided_load %arg6[%13, %c0_3] {strides = array<i32: 3, 1>} : memref<104x1xf32, #tpu.memory_space<vmem>>, vector<16x1xf32>
    %c3_i32 = arith.constant 3 : i32
    %15 = arith.addi %5, %c3_i32 : i32
    %16 = arith.index_cast %15 : i32 to index
    %c0_4 = arith.constant 0 : index
    %17 = tpu.strided_load %arg6[%16, %c0_4] {strides = array<i32: 3, 1>} : memref<104x1xf32, #tpu.memory_space<vmem>>, vector<16x1xf32>
    %c4_i32 = arith.constant 4 : i32
    %18 = arith.addi %5, %c4_i32 : i32
    %19 = arith.index_cast %18 : i32 to index
    %c0_5 = arith.constant 0 : index
    %20 = tpu.strided_load %arg6[%19, %c0_5] {strides = array<i32: 3, 1>} : memref<104x1xf32, #tpu.memory_space<vmem>>, vector<16x1xf32>
    %21 = tpu.concatenate %8, %11, %14, %17, %20 in 1 : vector<16x1xf32>, vector<16x1xf32>, vector<16x1xf32>, vector<16x1xf32>, vector<16x1xf32> -> vector<16x5xf32>
    %c0_6 = arith.constant 0 : index
    %c0_7 = arith.constant 0 : index
    %22 = vector.load %arg3[%c0_6, %c0_7] : memref<5x32xf32, #tpu.memory_space<vmem>>, vector<5x32xf32>
    %cst = arith.constant dense<0.000000e+00> : vector<16x32xf32>
    %23 = tpu.matmul %21, %22, %cst {dimension_numbers = #tpu.dot_dimension_numbers<[1], [0], [0], [1], [0, 0, 1, 1], [], []>} : vector<16x5xf32>, vector<5x32xf32>, vector<16x32xf32> -> vector<16x32xf32>
    %c0_8 = arith.constant 0 : index
    %c0_9 = arith.constant 0 : index
    %24 = vector.load %arg4[%c0_8, %c0_9] : memref<1x32xf32, #tpu.memory_space<vmem>>, vector<1x32xf32>
    %25 = vector.broadcast %24 : vector<1x32xf32> to vector<16x32xf32>
    %26 = arith.addf %23, %25 : vector<16x32xf32>
    %cst_10 = arith.constant 1.000000e-01 : f32
    %27 = vector.broadcast %cst_10 : f32 to vector<16x32xf32>
    %28 = arith.mulf %26, %27 : vector<16x32xf32>
    %29 = arith.maximumf %26, %28 : vector<16x32xf32>
    %c0_11 = arith.constant 0 : index
    %c0_12 = arith.constant 0 : index
    %c0_13 = arith.constant 0 : index
    %30 = vector.load %arg5[%c0_11, %c0_12, %c0_13] : memref<1x16x32xf32, #tpu.memory_space<vmem>>, vector<1x16x32xf32>
    %31 = vector.shape_cast %30 : vector<1x16x32xf32> to vector<16x32xf32>
    %32 = vector.shape_cast %29 : vector<16x32xf32> to vector<1x16x32xf32>
    tpu.vector_store %arg5[%c0_11, %c0_12, %c0_13], %32 {strides = array<i32>} : memref<1x16x32xf32, #tpu.memory_space<vmem>>, vector<1x16x32xf32>,
    return
  }
  func.func @transform_0(%arg0: i32, %arg1: i32) -> (i32, i32, i32) {
    %c0_i32 = arith.constant 0 : i32
    %c0_i32_0 = arith.constant 0 : i32
    %c0_i32_1 = arith.constant 0 : i32
    return %arg0, %c0_i32, %c0_i32_0 : i32, i32, i32
  }
  func.func @transform_1(%arg0: i32, %arg1: i32) -> (i32, i32) {
    %c0_i32 = arith.constant 0 : i32
    %c0_i32_0 = arith.constant 0 : i32
    %c0_i32_1 = arith.constant 0 : i32
    return %c0_i32, %c0_i32_0 : i32, i32
  }
  func.func @transform_2(%arg0: i32, %arg1: i32) -> (i32, i32) {
    %c0_i32 = arith.constant 0 : i32
    %c0_i32_0 = arith.constant 0 : i32
    %c0_i32_1 = arith.constant 0 : i32
    return %c0_i32, %c0_i32_0 : i32, i32
  }
  func.func @transform_3(%arg0: i32, %arg1: i32) -> (i32, i32, i32) {
    %c0_i32 = arith.constant 0 : i32
    %c0_i32_0 = arith.constant 0 : i32
    return %arg0, %arg1, %c0_i32 : i32, i32, i32
  }
}

</mosaic_0001>

<llo_original>
// kernel: tpu_custom_call.1
$region0: #{tpu_custom_call.1}
  #allocation0 [shape = 'u32[]', space=smem, size = 0x4, offset = 0x4, fixed_abs, tag = 'smem constant byte address 0x4 - core index']
  #allocation1 [shape = 'u32[144,128]{1,0:T(1,128)}', space=vmem, size = 0x12000, scoped, tag = 'internal scratch']
  #allocation2 [shape = 'f32[104,1]{1,0:T(8,128)}', space=vmem, size = 0xd000, scoped, tag = 'scratch operand']
  %s0 = inlined_call_operand.vmem [shape: f32[6,84,1], index: 0, kind: input, shape index: {}]
  %s1 = inlined_call_operand.vmem [shape: f32[5,32], index: 1, kind: input, shape index: {}]
  %s2 = inlined_call_operand.vmem [shape: f32[1,32], index: 2, kind: input, shape index: {}]
  %s3 = inlined_call_operand.hbm [shape: f32[6,32,32], index: 3, kind: output, shape index: {}]
  %s4 = sld [smem:[#allocation0]]
  $region49: #{tpu_custom_call.1} parent=0
    _
  %s6 = ssub.s32 1, %s4
  %s7 = scalar_select 0, %s6, %s4
  $region1: #{tpu_custom_call.1} parent=0
    #allocation3 [shape = 'u8[16384]{0}', space=vmem, size = 0x4000, scoped, tag = 'output window, operand 0']
    #allocation4 [shape = 's32[2]{0}', space=sflag, size = 0x8, scoped, tag = 'scoped memory for tpu_custom_call.1']
    %8 = vsyncpa [#allocation4], 0
    %s9 = scalar_lea.sflag [#allocation4], 1
    %10 = vsyncpa %s9, 0
    loop: start=0, step=1, limit=14
    $region2: #{tpu_custom_call.1} parent=1 // loop_pre_header
      _
    $region3: #{tpu_custom_call.1} parent=1 // loop_header
      %s12 = sphi 0, %s16
      %p13 = scmp.ge.s32.totalorder %s12, 14
      %s19 = sphi 0, %s31
      %s20 = sphi 0, %s27
      %s21 = sphi 0, %s19
      %s22 = sphi 0, %s20
      %s23 = sphi 0, %s21
      %s24 = sphi 0, %s22
      %s34 = sphi 0, %s36
      %s37 = sphi 0, %s34
      %s38 = sphi 0, %s37
      %s54 = sphi 0, %s38
      %s58 = sphi 0, %s58
      %s60 = sphi 0, %s58
      %s61 = sphi 0, %s60
      %s75 = sphi 0, %s61
      %s79 = sphi 0, %s79
      %s81 = sphi 0, %s79
      %s82 = sphi 0, %s81
      %s96 = sphi 0, %s82
      %s104 = sphi 0, %s106
      %s107 = sphi 0, %s104
      %s108 = sphi 0, %s107
      %s124 = sphi 0, %s108
    $region4: #{tpu_custom_call.1} parent=1 // loop_header_branch
      %15 = sbr.rel (%p13) target = $region8
    $region5: #{tpu_custom_call.1} parent=1 // loop_body
      %s17 = ssub.s32 %s12, 1
      %s18 = ssub.s32 %s12, 2
      %s25 = sadd.s32 1, %s20
      %p26 = scmp.ge.s32.totalorder %s25, 2
      %s27 = scalar_select %p26, 0, %s25
      %s28 = sadd.s32 1, %s19
      %s29 = scalar_select %p26, %s28, %s19
      %p30 = scmp.ge.s32.totalorder %s29, 6
      %s31 = scalar_select %p30, 0, %s29
      %s32 = ssub.s32 %s19, %s31
      %p33 = scmp.eq.s32.totalorder %s32, 0
      %s35 = sadd.s32 %s34, 1
      %s36 = scalar_select %p33, %s34, %s35
      %p39 = pneg %p33
      %p40 = scmp.eq.s32.totalorder %s12, 11
      %p41 = por %p39, %p40
      %p42 = scmp.ne.s32.totalorder %s34, %s37
      %p43 = scmp.eq.s32.totalorder %s12, 0
      %p44 = por %p42, %p43
      %p45 = scmp.ne.s32.totalorder %s34, %s37
      %p46 = scmp.eq.s32.totalorder %s17, 11
      %p47 = por %p45, %p46
      %p48 = scmp.ne.s32.totalorder %s37, %s38
      %p49 = scmp.eq.s32.totalorder %s17, 0
      %p50 = por %p48, %p49
      %p51 = scmp.ne.s32.totalorder %s37, %s38
      %p52 = scmp.eq.s32.totalorder %s18, 11
      %p53 = por %p51, %p52
      %p55 = scmp.ne.s32.totalorder %s38, %s54
      %p56 = scmp.eq.s32.totalorder %s18, 0
      %p57 = por %p55, %p56
      %s59 = sadd.s32 %s58, 1
      %p62 = scmp.eq.s32.totalorder %s12, 11
      %p63 = scmp.ne.s32.totalorder %s58, %s60
      %p64 = scmp.eq.s32.totalorder %s12, 0
      %p65 = por %p63, %p64
      %p66 = scmp.ne.s32.totalorder %s58, %s60
      %p67 = scmp.eq.s32.totalorder %s17, 11
      %p68 = por %p66, %p67
      %p69 = scmp.ne.s32.totalorder %s60, %s61
      %p70 = scmp.eq.s32.totalorder %s17, 0
      %p71 = por %p69, %p70
      %p72 = scmp.ne.s32.totalorder %s60, %s61
      %p73 = scmp.eq.s32.totalorder %s18, 11
      %p74 = por %p72, %p73
      %p76 = scmp.ne.s32.totalorder %s61, %s75
      %p77 = scmp.eq.s32.totalorder %s18, 0
      %p78 = por %p76, %p77
      %s80 = sadd.s32 %s79, 1
      %p83 = scmp.eq.s32.totalorder %s12, 11
      %p84 = scmp.ne.s32.totalorder %s79, %s81
      %p85 = scmp.eq.s32.totalorder %s12, 0
      %p86 = por %p84, %p85
      %p87 = scmp.ne.s32.totalorder %s79, %s81
      %p88 = scmp.eq.s32.totalorder %s17, 11
      %p89 = por %p87, %p88
      %p90 = scmp.ne.s32.totalorder %s81, %s82
      %p91 = scmp.eq.s32.totalorder %s17, 0
      %p92 = por %p90, %p91
      %p93 = scmp.ne.s32.totalorder %s81, %s82
      %p94 = scmp.eq.s32.totalorder %s18, 11
      %p95 = por %p93, %p94
      %p97 = scmp.ne.s32.totalorder %s82, %s96
      %p98 = scmp.eq.s32.totalorder %s18, 0
      %p99 = por %p97, %p98
      %s100 = ssub.s32 %s19, %s31
      %s101 = ssub.s32 %s20, %s27
      %s102 = sor.u32 %s100, %s101
      %p103 = scmp.eq.s32.totalorder %s102, 0
      %s105 = sadd.s32 %s104, 1
      %s106 = scalar_select %p103, %s104, %s105
      %p109 = pneg %p103
      %p110 = scmp.eq.s32.totalorder %s12, 11
      %p111 = por %p109, %p110
      %p112 = scmp.ne.s32.totalorder %s104, %s107
      %p113 = scmp.eq.s32.totalorder %s12, 0
      %p114 = por %p112, %p113
      %p115 = scmp.ne.s32.totalorder %s104, %s107
      %p116 = scmp.eq.s32.totalorder %s17, 11
      %p117 = por %p115, %p116
      %p118 = scmp.ne.s32.totalorder %s107, %s108
      %p119 = scmp.eq.s32.totalorder %s17, 0
      %p120 = por %p118, %p119
      %p121 = scmp.ne.s32.totalorder %s107, %s108
      %p122 = scmp.eq.s32.totalorder %s18, 11
      %p123 = por %p121, %p122
      %p125 = scmp.ne.s32.totalorder %s108, %s124
      %p126 = scmp.eq.s32.totalorder %s18, 0
      %p127 = por %p125, %p126
      %p128 = scmp.le.s32.totalorder 1, %s12
      %p129 = scmp.lt.s32.totalorder %s12, 13
      %p130 = pnand %p128, %p129
      %p131 = pneg %p130
      // Predicated region
      $region9: #{tpu_custom_call.1} parent=5 // pred_check
        _
      $region10: #{tpu_custom_call.1} parent=5 // pred_check_branch
        %133 = sbr.rel (%p130) target = $region12
      $region11: #{tpu_custom_call.1} parent=5 // pred_region
        %s134 = ssub.s32 %s12, 1
        // Predicated region
        $region13: #{tpu_custom_call.1} parent=11 // pred_check
          %p135 = pneg %p71
        $region14: #{tpu_custom_call.1} parent=11 // pred_check_branch
          %137 = sbr.rel (%p135) target = $region16
        $region15: #{tpu_custom_call.1} parent=11 // pred_region
          _
        $region16: #{tpu_custom_call.1} parent=11 // pred_fallthru
          _
        // Predicated region
        $region17: #{tpu_custom_call.1} parent=11 // pred_check
          %p138 = pneg %p92
        $region18: #{tpu_custom_call.1} parent=11 // pred_check_branch
          %140 = sbr.rel (%p138) target = $region20
        $region19: #{tpu_custom_call.1} parent=11 // pred_region
          _
        $region20: #{tpu_custom_call.1} parent=11 // pred_fallthru
          _
      $region12: #{tpu_custom_call.1} parent=5 // pred_fallthru
        _
      %p141 = scmp.lt.s32.totalorder %s12, 12
      // Predicated region
      $region21: #{tpu_custom_call.1} parent=5 // pred_check
        %p142 = pneg %p141
      $region22: #{tpu_custom_call.1} parent=5 // pred_check_branch
        %144 = sbr.rel (%p142) target = $region24
      $region23: #{tpu_custom_call.1} parent=5 // pred_region
        // Predicated region
        $region25: #{tpu_custom_call.1} parent=23 // pred_check
          %p145 = pneg %p44
        $region26: #{tpu_custom_call.1} parent=23 // pred_check_branch
          %147 = sbr.rel (%p145) target = $region28
        $region27: #{tpu_custom_call.1} parent=23 // pred_region
          %p148 = scmp.lt.s32.totalorder %s19, 5
          %s149 = scalar_select %p148, %s19, 5
          %s150 = smul.addr %s149, 11
          %s151 = smul.addr %s150, 8
          %s152 = scalar_lea.vmem %s0, %s151
        $region28: #{tpu_custom_call.1} parent=23 // pred_fallthru
          _
      $region24: #{tpu_custom_call.1} parent=5 // pred_fallthru
        _
      %p153 = scmp.le.s32.totalorder 1, %s12
      %p154 = scmp.lt.s32.totalorder %s12, 13
      %p155 = pnand %p153, %p154
      %p156 = pneg %p155
      // Predicated region
      $region29: #{tpu_custom_call.1} parent=5 // pred_check
        _
      $region30: #{tpu_custom_call.1} parent=5 // pred_check_branch
        %158 = sbr.rel (%p155) target = $region32
      $region31: #{tpu_custom_call.1} parent=5 // pred_region
        %s159 = ssub.s32 %s12, 1
        %p160 = scmp.lt.s32.totalorder %s21, 5
        %s161 = scalar_select %p160, %s21, 5
        %s162 = smul.addr %s161, 11
        %s163 = smul.addr %s162, 8
        %s164 = scalar_lea.vmem %s0, %s163
        %p165 = pneg %p50
        %p166 = pneg %p47
        %p167 = pneg %p71
        %p168 = pneg %p68
        %p169 = pneg %p92
        %p170 = pneg %p89
        %p171 = pneg %p120
        %p172 = pneg %p117
        %s173 = sand.u32 %s107, 1
        %s174 = scalar_lea.sflag [#allocation4], %s173
        %s175 = sand.u32 %s107, 1
        %s176 = smul.addr %s175, 16
        %s177 = scalar_lea.vmem [#allocation3], %s176
        %p178 = scmp.lt.s32.totalorder %s21, 5
        %s179 = scalar_select %p178, %s21, 5
        %s180 = smul.addr %s179, 11
        %s181 = smul.addr %s180, 8
        %s182 = scalar_lea.vmem %s0, %s181
        %s183 = smul.u32 2, %s22
        %p184 = scmp.eq.s32.totalorder %s22, 0
        // Predicated region
        $region33: #{tpu_custom_call.1} parent=31 // pred_check
          %p185 = pneg %p184
        $region34: #{tpu_custom_call.1} parent=31 // pred_check_branch
          %187 = sbr.rel (%p185) target = $region36
        $region35: #{tpu_custom_call.1} parent=31 // pred_region
          %vm188 = vcmask 7168
          %189 = vst.msk [vmem:[#allocation2] sm:$0xff] %vm188, 0.0
          %190 = vst.msk [vmem:[#allocation2 + $0x5c] sm:$0xff] %vm188, 0.0
          %vm191 = vcmask 3072
          %192 = vst.msk [vmem:[#allocation2 + $0x64] sm:$0xf] %vm191, 0.0
          %v193 = vld [vmem:[%s182] sm:$0xff]
          %v194 = vld [vmem:[%s182 + $0x8] sm:$0xff]
          %v195 = vld [vmem:[%s182 + $0x10] sm:$0xff]
          %v196 = vld [vmem:[%s182 + $0x18] sm:$0xff]
          %v197 = vld [vmem:[%s182 + $0x20] sm:$0xff]
          %v198 = vld [vmem:[%s182 + $0x28] sm:$0xff]
          %v199 = vld [vmem:[%s182 + $0x30] sm:$0xff]
          %v200 = vld [vmem:[%s182 + $0x38] sm:$0xff]
          %v201 = vld [vmem:[%s182 + $0x40] sm:$0xff]
          %v202 = vld [vmem:[%s182 + $0x48] sm:$0xff]
          %v203 = vld [vmem:[%s182 + $0x50] sm:$0xf]
          %204 = vst.msk [vmem:[#allocation2 + $0x8] sm:$0xff] %vm188, %v193
          %205 = vst.msk [vmem:[#allocation2 + $0x10] sm:$0xff] %vm188, %v194
          %206 = vst.msk [vmem:[#allocation2 + $0x18] sm:$0xff] %vm188, %v195
          %207 = vst.msk [vmem:[#allocation2 + $0x20] sm:$0xff] %vm188, %v196
          %208 = vst.msk [vmem:[#allocation2 + $0x28] sm:$0xff] %vm188, %v197
          %209 = vst.msk [vmem:[#allocation2 + $0x30] sm:$0xff] %vm188, %v198
          %210 = vst.msk [vmem:[#allocation2 + $0x38] sm:$0xff] %vm188, %v199
          %211 = vst.msk [vmem:[#allocation2 + $0x40] sm:$0xff] %vm188, %v200
          %212 = vst.msk [vmem:[#allocation2 + $0x48] sm:$0xff] %vm188, %v201
          %213 = vst.msk [vmem:[#allocation2 + $0x50] sm:$0xff] %vm188, %v202
          %214 = vst.msk [vmem:[#allocation2 + $0x58] sm:$0xf] %vm191, %v203
        $region36: #{tpu_custom_call.1} parent=31 // pred_fallthru
          _
        %s215 = smul.u32 %s22, 48
        %s216 = sadd.s32 %s215, 6
        %s217 = scalar_lea.vmem [#allocation2], %s216
        %v218 = vld [vmem:[%s217] ss:$3 sm:$0xff]
        %s219 = scalar_lea.vmem %s217, 24 [#allocation2]
        %v220 = vld [vmem:[%s219] ss:$3 sm:$0xff]
        %s221 = sadd.s32 %s215, 7
        %s222 = scalar_lea.vmem [#allocation2], %s221
        %v223 = vld [vmem:[%s222] ss:$3 sm:$0xff]
        %s224 = scalar_lea.vmem %s222, 24 [#allocation2]
        %v225 = vld [vmem:[%s224] ss:$3 sm:$0xff]
        %s226 = sadd.s32 %s215, 8
        %s227 = scalar_lea.vmem [#allocation2], %s226
        %v228 = vld [vmem:[%s227] ss:$3 sm:$0xff]
        %s229 = scalar_lea.vmem %s227, 24 [#allocation2]
        %v230 = vld [vmem:[%s229] ss:$3 sm:$0xff]
        %s231 = sadd.s32 %s215, 9
        %s232 = scalar_lea.vmem [#allocation2], %s231
        %v233 = vld [vmem:[%s232] ss:$3 sm:$0xff]
        %s234 = scalar_lea.vmem %s232, 24 [#allocation2]
        %v235 = vld [vmem:[%s234] ss:$3 sm:$0xff]
        %s236 = sadd.s32 %s215, 10
        %s237 = scalar_lea.vmem [#allocation2], %s236
        %v238 = vld [vmem:[%s237] ss:$3 sm:$0xff]
        %s239 = scalar_lea.vmem %s237, 24 [#allocation2]
        %v240 = vld [vmem:[%s239] ss:$3 sm:$0xff]
        %243 = vrot.lane.b32.xlu0 %v223, 1
        %v244 = vpop.permute.xlu0 %243
        %245 = vrot.lane.b32.xlu0 %v225, 1
        %v246 = vpop.permute.xlu0 %245
        %251 = vrot.lane.b32.xlu0 %v228, 2
        %v252 = vpop.permute.xlu0 %251
        %253 = vrot.lane.b32.xlu0 %v230, 2
        %v254 = vpop.permute.xlu0 %253
        %259 = vrot.lane.b32.xlu0 %v233, 3
        %v260 = vpop.permute.xlu0 %259
        %261 = vrot.lane.b32.xlu0 %v235, 3
        %v262 = vpop.permute.xlu0 %261
        %267 = vrot.lane.b32.xlu0 %v238, 4
        %v268 = vpop.permute.xlu0 %267
        %269 = vrot.lane.b32.xlu0 %v240, 4
        %v270 = vpop.permute.xlu0 %269
        %vm273 = vcmask 7168
        %v274 = vsel %vm273, %v218, %v244
        %v275 = vsel %vm273, %v220, %v246
        %vm276 = vcmask 15360
        %v277 = vsel %vm276, %v274, %v252
        %v278 = vsel %vm276, %v275, %v254
        %vm279 = vcmask 23552
        %v280 = vsel %vm279, %v277, %v260
        %v281 = vsel %vm279, %v278, %v262
        %vm282 = vcmask 31744
        %v283 = vsel %vm282, %v280, %v268
        %v284 = vsel %vm282, %v281, %v270
        %v285 = vld [vmem:[%s1] sm:$0x1f]
        %v286 = vld [vmem:[%s2] sm:$0x1]
        %v288 = vlaneseq
        %v289 = vshrl.u32 %v288, 7
        %v290 = vsub.s32 0, %v289
        %v291 = vrot.slane %v286, %v290
        %vm293 = vcmask 39936
        %v295 = vsel %vm293, %v283, 0
        %v298 = vsel %vm293, %v284, 0
        %vm300 = vcmask 1044480
        %v302 = vsel %vm300, %v285, 0
        %304 = vmatprep.subr.mxu0 0.0
        %305 = vmatpush1.msra.mxu0 %v302
        %306 = vmatprep.subr.mxu0 0.0
        %307 = vmatpush1.msra.mxu0 0.0
        %308 = vmatprep.subr.mxu0 0.0
        %309 = vmatpush1.msra.mxu0 0.0
        %310 = vmatprep.subr.mxu0 0.0
        %311 = vmatpush1.msra.mxu0 0.0
        %312 = vmatprep.subr.mxu0 0.0
        %313 = vmatpush1.msra.mxu0 0.0
        %314 = vmatprep.subr.mxu0 0.0
        %315 = vmatpush1.msra.mxu0 0.0
        %316 = vmatprep.subr.mxu0 0.0
        %317 = vmatpush1.msra.mxu0 0.0
        %318 = vmatprep.subr.mxu0 0.0
        %319 = vmatpush1.msra.mxu0 0.0
        %320 = vmatprep.subr.mxu0 0.0
        %321 = vmatpush1.msra.mxu0 0.0
        %322 = vmatprep.subr.mxu0 0.0
        %323 = vmatpush1.msra.mxu0 0.0
        %324 = vmatprep.subr.mxu0 0.0
        %325 = vmatpush1.msra.mxu0 0.0
        %326 = vmatprep.subr.mxu0 0.0
        %327 = vmatpush1.msra.mxu0 0.0
        %328 = vmatprep.subr.mxu0 0.0
        %329 = vmatpush1.msra.mxu0 0.0
        %330 = vmatprep.subr.mxu0 0.0
        %331 = vmatpush1.msra.mxu0 0.0
        %332 = vmatprep.subr.mxu0 0.0
        %333 = vmatpush1.msra.mxu0 0.0
        %334 = vmatprep.subr.mxu0 0.0
        %335 = vmatpush1.msra.mxu0 0.0
        %336 = vmatprep.subr.mxu0 0.0
        %337 = vmatpush1.msra.mxu0 0.0
        %338 = vmatprep.subr.mxu0 0.0
        %339 = vmatpush1.msra.mxu0 0.0
        %340 = vmatprep.subr.mxu0 0.0
        %341 = vmatpush1.msra.mxu0 0.0
        %342 = vmatprep.subr.mxu0 0.0
        %343 = vmatpush1.msra.mxu0 0.0
        %344 = vmatprep.subr.mxu0 0.0
        %345 = vmatpush1.msra.mxu0 0.0
        %346 = vmatprep.subr.mxu0 0.0
        %347 = vmatpush1.msra.mxu0 0.0
        %348 = vmatprep.subr.mxu0 0.0
        %349 = vmatpush1.msra.mxu0 0.0
        %350 = vmatprep.subr.mxu0 0.0
        %351 = vmatpush1.msra.mxu0 0.0
        %352 = vmatprep.subr.mxu0 0.0
        %353 = vmatpush1.msra.mxu0 0.0
        %354 = vmatprep.subr.mxu0 0.0
        %355 = vmatpush1.msra.mxu0 0.0
        %356 = vmatprep.subr.mxu0 0.0
        %357 = vmatpush1.msra.mxu0 0.0
        %358 = vmatprep.subr.mxu0 0.0
        %359 = vmatpush1.msra.mxu0 0.0
        %360 = vmatprep.subr.mxu0 0.0
        %361 = vmatpush1.msra.mxu0 0.0
        %362 = vmatprep.subr.mxu0 0.0
        %363 = vmatpush1.msra.mxu0 0.0
        %364 = vmatprep.subr.mxu0 0.0
        %365 = vmatpush1.msra.mxu0 0.0
        %366 = vmatprep.subr.mxu0 0.0
        %367 = vmatpush1.msra.mxu0 0.0
        %368 = vmatprep.mubr.f32.mxu0 0.0
        %369 = vmatmul.mubr.f32.gmra.mrb[0].mxu0 %v295
        %v370 = vpop.f32.mrb[0].mxu0
        %v371 = vadd.f32 %v291, %v370
        %v372 = vpop.f32.mrb[0].mxu0
        %373 = vmatprep.mubr.f32.mxu0 0.0
        %374 = vmatmul.mubr.f32.gmra.mrb[0].mxu0 %v298
        %v375 = vpop.f32.mrb[0].mxu0
        %v376 = vadd.f32 %v291, %v375
        %v377 = vpop.f32.mrb[0].mxu0
        %378 = vdwg.mxu0
        %v379 = vmul.f32 %v371, 0.1
        %v380 = vmul.f32 %v376, 0.1
        %v381 = vmax.f32 %v371, %v379
        %v382 = vmax.f32 %v376, %v380
        %vm383 = vcmask 261120
        %384 = vst.msk [vmem:[%s177] sm:$0xff] %vm383, %v381
        %385 = vst.msk [vmem:[%s177 + $0x8] sm:$0xff] %vm383, %v382
        %s386 = sand.u32 %s107, 1
        %s387 = scalar_lea.sflag [#allocation4], %s386
        %s388 = sand.u32 %s107, 1
        %s389 = smul.addr %s388, 16
        %s390 = scalar_lea.vmem [#allocation3], %s389
        // Predicated region
        $region37: #{tpu_custom_call.1} parent=31 // pred_check
          %p391 = pneg %p117
        $region38: #{tpu_custom_call.1} parent=31 // pred_check_branch
          %393 = sbr.rel (%p391) target = $region40
        $region39: #{tpu_custom_call.1} parent=31 // pred_region
          %s394 = smul.u32 2, %s22
          %s396 = ssub.s32 256, 256
          %397 = vsyncadd %s387, %s396
          %s398 = smul.addr %s21, 4
          %s399 = sadd.s32 %s394, %s398
          %s400 = smul.addr %s399, 128
          %s401 = scalar_lea.hbm %s3, %s400
          %s402 = sshll.u32 %s390, 4
          %s403 = int_to_ptr.vmem [resolvable:$true] %s402
          %408 = dma.vmem_to_hbm [thread:$0]  %s403, 256, %s401, %s387, 128, 128, 8
        $region40: #{tpu_custom_call.1} parent=31 // pred_fallthru
          _
      $region32: #{tpu_custom_call.1} parent=5 // pred_fallthru
        _
      %p409 = scmp.le.s32.totalorder 2, %s12
      // Predicated region
      $region41: #{tpu_custom_call.1} parent=5 // pred_check
        %p410 = pneg %p409
      $region42: #{tpu_custom_call.1} parent=5 // pred_check_branch
        %412 = sbr.rel (%p410) target = $region44
      $region43: #{tpu_custom_call.1} parent=5 // pred_region
        %s413 = ssub.s32 %s12, 2
        // Predicated region
        $region45: #{tpu_custom_call.1} parent=43 // pred_check
          %p414 = pneg %p123
        $region46: #{tpu_custom_call.1} parent=43 // pred_check_branch
          %416 = sbr.rel (%p414) target = $region48
        $region47: #{tpu_custom_call.1} parent=43 // pred_region
          %s417 = sand.u32 %s108, 1
          %s418 = scalar_lea.sflag [#allocation4], %s417
          %s419 = sand.u32 %s108, 1
          %s420 = smul.addr %s419, 16
          %s421 = scalar_lea.vmem [#allocation3], %s420
          %422 = dma.done %s418, 256
        $region48: #{tpu_custom_call.1} parent=43 // pred_fallthru
          _
      $region44: #{tpu_custom_call.1} parent=5 // pred_fallthru
        _
    $region6: #{tpu_custom_call.1} parent=1 // loop_footer
      %s16 = sadd.s32 1, %s12
    $region7: #{tpu_custom_call.1} parent=1 // loop_footer_branch
      %11 = sbr.rel target = $region3
    $region8: #{tpu_custom_call.1} parent=1 // loop_exit
      _
    %423 = vsyncpa [#allocation4], 1
    %s424 = scalar_lea.sflag [#allocation4], 1
    %425 = vsyncpa %s424, 1

</llo_original>
